<compile_context>
chip_gen: v6e
topology: v6e:2x2x1
jax: 0.10.0
libtpu: 0.0.40
codegen_flags: <defaults>
</compile_context>

<pallas_src>
import jax
import jax.numpy as jnp
from jax.experimental import pallas as pl
from jax.experimental.pallas import tpu as pltpu

_LANE = 128


def _mlp_kernel(x_ref, w1_ref, b1_ref, w2_ref, b2_ref, o_ref):
    # Fused per batch tile: Linear(253->12) -> ReLU -> Linear(12->C_pad).
    # No explicit dtype casts on inputs: the MXU up-converts via
    # preferred_element_type, accumulation stays in f32.
    x = x_ref[...]                                              # (TB, 253)
    h = jnp.dot(x, w1_ref[...], preferred_element_type=jnp.float32)
    h = jnp.maximum(h + b1_ref[...], 0.0)                       # (TB, 12) f32
    y = jnp.dot(h, w2_ref[...], preferred_element_type=jnp.float32)
    o_ref[...] = (y + b2_ref[...]).astype(o_ref.dtype)          # (TB, C_pad) lane-dense


def _round_up(n, m):
    return ((n + m - 1) // m) * m


def neural_net_m_forward(x, w1, b1, w2, b2, *, tb_max=1024):
    """x: (B, 253); w1: (253, 12); b1: (12,); w2: (12, C); b2: (C,)."""
    B, K = x.shape
    C = w2.shape[1]
    C_pad = _round_up(C, _LANE)

    # Pad the (tiny) second-layer weights/bias along the output-feature axis so
    # the kernel writes full 128-lane slabs (unmasked vst) instead of 6/128
    # masked stores.  The pad is a one-off on a 12xC array -> negligible.
    w2p = jnp.zeros((w2.shape[0], C_pad), w2.dtype).at[:, :C].set(w2)
    b2p = jnp.zeros((1, C_pad), b2.dtype).at[0, :C].set(b2)
    b1_2d = b1.reshape(1, -1)

    # Batch tile: large enough to hit the HBM roofline (kernel is mem-bound on
    # streaming x), small enough that double-buffered x tiles + output tiles
    # fit v5e's 16 MiB default scoped VMEM and v7x's 64 MiB physical VMEM
    # (~1 MiB per x buffer at TB=1024).
    if B <= tb_max:
        tb = B        # full-array block; allowed even if B is not 8-aligned
    else:
        tb = tb_max   # multiple of 8; last partial tile is masked by Pallas

    grid = (pl.cdiv(B, tb),)

    out = pl.pallas_call(
        _mlp_kernel,
        out_shape=jax.ShapeDtypeStruct((B, C_pad), x.dtype),
        grid=grid,
        in_specs=[
            pl.BlockSpec((tb, K), lambda i: (i, 0)),       # streamed x tiles (double-buffered)
            pl.BlockSpec(w1.shape, lambda i: (0, 0)),      # weights/biases stay resident
            pl.BlockSpec(b1_2d.shape, lambda i: (0, 0)),
            pl.BlockSpec(w2p.shape, lambda i: (0, 0)),
            pl.BlockSpec(b2p.shape, lambda i: (0, 0)),
        ],
        out_specs=pl.BlockSpec((tb, C_pad), lambda i: (i, 0)),
        compiler_params=pltpu.CompilerParams(
            # Batch axis is embarrassingly parallel -> megacore sharding on
            # v7x (2 TCs); harmless no-op on v5e/v6e.
            dimension_semantics=("parallel",),
        ),
    )(x, w1, b1_2d, w2p, b2p)
    return out[:, :C]


def init_params(key, num_classes):
    """Deterministic init mimicking nn.Linear shapes (Kaiming-uniform-ish)."""
    k1, k2, k3, k4 = jax.random.split(key, 4)
    in1, out1 = 253, 12
    in2, out2 = 12, num_classes
    bound1 = 1.0 / jnp.sqrt(in1)
    bound2 = 1.0 / jnp.sqrt(in2)
    # Stored pre-transposed: (in_features, out_features)
    w1 = jax.random.uniform(k1, (in1, out1), jnp.float32, -bound1, bound1)
    b1 = jax.random.uniform(k2, (out1,), jnp.float32, -bound1, bound1)
    w2 = jax.random.uniform(k3, (in2, out2), jnp.float32, -bound2, bound2)
    b2 = jax.random.uniform(k4, (out2,), jnp.float32, -bound2, bound2)
    return w1, b1, w2, b2


def _ref(x, w1, b1, w2, b2):
    return jnp.maximum(x @ w1 + b1, 0.0) @ w2 + b2


if __name__ == "__main__":
    key = jax.random.PRNGKey(0)
    kx_small, kx_big, kp = jax.random.split(key, 3)

    num_classes = 6
    w1, b1, w2, b2 = init_params(kp, num_classes)

    # Small-batch path (single full-array tile, grid=(1,)).
    x_small = jax.random.normal(kx_small, (4, 253), dtype=jnp.float32)
    out_small = jax.block_until_ready(
        neural_net_m_forward(x_small, w1, b1, w2, b2))
    assert out_small.shape == (4, num_classes)
    assert jnp.allclose(out_small, _ref(x_small, w1, b1, w2, b2),
                        atol=1e-5, rtol=1e-5)

    # Batch-tiled path (multiple grid steps + masked partial last tile).
    x_big = jax.random.normal(kx_big, (2600, 253), dtype=jnp.float32)
    out_big = jax.block_until_ready(
        neural_net_m_forward(x_big, w1, b1, w2, b2))
    assert out_big.shape == (2600, num_classes)
    assert jnp.allclose(out_big, _ref(x_big, w1, b1, w2, b2),
                        atol=1e-5, rtol=1e-5)

    print("KERNEL_OK")
</pallas_src>

<mosaic_0001>
module attributes {stable_mosaic.version = 11 : i64} {
  func.func @_mlp_kernel(%arg0: i32, %arg1: memref<4x253xf32, #tpu.memory_space<vmem>>, %arg2: memref<253x12xf32, #tpu.memory_space<vmem>>, %arg3: memref<1x12xf32, #tpu.memory_space<vmem>>, %arg4: memref<12x128xf32, #tpu.memory_space<vmem>>, %arg5: memref<1x128xf32, #tpu.memory_space<vmem>>, %arg6: memref<4x128xf32, #tpu.memory_space<vmem>>) attributes {dimension_semantics = [#tpu.dimension_semantics<parallel>], iteration_bounds = array<i64: 1>, scalar_prefetch = 0 : i64, scratch_operands = 0 : i64, tpu.core_type = #tpu.core_type<tc>, window_params = [{transform_indices = @transform_0, window_bounds = array<i64: 4, 253>}, {pipeline_mode = #tpu.pipeline_mode<synchronous>, transform_indices = @transform_1, window_bounds = array<i64: 253, 12>}, {pipeline_mode = #tpu.pipeline_mode<synchronous>, transform_indices = @transform_2, window_bounds = array<i64: 1, 12>}, {pipeline_mode = #tpu.pipeline_mode<synchronous>, transform_indices = @transform_3, window_bounds = array<i64: 12, 128>}, {pipeline_mode = #tpu.pipeline_mode<synchronous>, transform_indices = @transform_4, window_bounds = array<i64: 1, 128>}, {transform_indices = @transform_5, window_bounds = array<i64: 4, 128>}]} {
    %c0 = arith.constant 0 : index
    %c0_0 = arith.constant 0 : index
    %0 = vector.load %arg1[%c0, %c0_0] : memref<4x253xf32, #tpu.memory_space<vmem>>, vector<4x253xf32>
    %c0_1 = arith.constant 0 : index
    %c0_2 = arith.constant 0 : index
    %1 = vector.load %arg2[%c0_1, %c0_2] : memref<253x12xf32, #tpu.memory_space<vmem>>, vector<253x12xf32>
    %cst = arith.constant dense<0.000000e+00> : vector<4x12xf32>
    %2 = tpu.matmul %0, %1, %cst {dimension_numbers = #tpu.dot_dimension_numbers<[1], [0], [0], [1], [0, 0, 1, 1], [], []>} : vector<4x253xf32>, vector<253x12xf32>, vector<4x12xf32> -> vector<4x12xf32>
    %c0_3 = arith.constant 0 : index
    %c0_4 = arith.constant 0 : index
    %3 = vector.load %arg3[%c0_3, %c0_4] : memref<1x12xf32, #tpu.memory_space<vmem>>, vector<1x12xf32>
    %4 = vector.broadcast %3 : vector<1x12xf32> to vector<4x12xf32>
    %5 = arith.addf %2, %4 : vector<4x12xf32>
    %cst_5 = arith.constant 0.000000e+00 : f32
    %6 = vector.broadcast %cst_5 : f32 to vector<4x12xf32>
    %7 = arith.maximumf %5, %6 : vector<4x12xf32>
    %c0_6 = arith.constant 0 : index
    %c0_7 = arith.constant 0 : index
    %8 = vector.load %arg4[%c0_6, %c0_7] : memref<12x128xf32, #tpu.memory_space<vmem>>, vector<12x128xf32>
    %cst_8 = arith.constant dense<0.000000e+00> : vector<4x128xf32>
    %9 = tpu.matmul %7, %8, %cst_8 {dimension_numbers = #tpu.dot_dimension_numbers<[1], [0], [0], [1], [0, 0, 1, 1], [], []>} : vector<4x12xf32>, vector<12x128xf32>, vector<4x128xf32> -> vector<4x128xf32>
    %c0_9 = arith.constant 0 : index
    %c0_10 = arith.constant 0 : index
    %10 = vector.load %arg5[%c0_9, %c0_10] : memref<1x128xf32, #tpu.memory_space<vmem>>, vector<1x128xf32>
    %11 = vector.broadcast %10 : vector<1x128xf32> to vector<4x128xf32>
    %12 = arith.addf %9, %11 : vector<4x128xf32>
    %c0_11 = arith.constant 0 : index
    %c0_12 = arith.constant 0 : index
    %13 = vector.load %arg6[%c0_11, %c0_12] : memref<4x128xf32, #tpu.memory_space<vmem>>, vector<4x128xf32>
    tpu.vector_store %arg6[%c0_11, %c0_12], %12 {strides = array<i32>} : memref<4x128xf32, #tpu.memory_space<vmem>>, vector<4x128xf32>,
    return
  }
  func.func @transform_0(%arg0: i32) -> (i32, i32) {
    %c0_i32 = arith.constant 0 : i32
    %c0_i32_0 = arith.constant 0 : i32
    return %arg0, %c0_i32 : i32, i32
  }
  func.func @transform_1(%arg0: i32) -> (i32, i32) {
    %c0_i32 = arith.constant 0 : i32
    %c0_i32_0 = arith.constant 0 : i32
    %c0_i32_1 = arith.constant 0 : i32
    return %c0_i32, %c0_i32_0 : i32, i32
  }
  func.func @transform_2(%arg0: i32) -> (i32, i32) {
    %c0_i32 = arith.constant 0 : i32
    %c0_i32_0 = arith.constant 0 : i32
    %c0_i32_1 = arith.constant 0 : i32
    return %c0_i32, %c0_i32_0 : i32, i32
  }
  func.func @transform_3(%arg0: i32) -> (i32, i32) {
    %c0_i32 = arith.constant 0 : i32
    %c0_i32_0 = arith.constant 0 : i32
    %c0_i32_1 = arith.constant 0 : i32
    return %c0_i32, %c0_i32_0 : i32, i32
  }
  func.func @transform_4(%arg0: i32) -> (i32, i32) {
    %c0_i32 = arith.constant 0 : i32
    %c0_i32_0 = arith.constant 0 : i32
    %c0_i32_1 = arith.constant 0 : i32
    return %c0_i32, %c0_i32_0 : i32, i32
  }
  func.func @transform_5(%arg0: i32) -> (i32, i32) {
    %c0_i32 = arith.constant 0 : i32
    %c0_i32_0 = arith.constant 0 : i32
    return %arg0, %c0_i32 : i32, i32
  }
}

</mosaic_0001>

<llo_original>
// kernel: tpu_custom_call.1
$region0: #{tpu_custom_call.1}
  #allocation0 [shape = 'u32[]', space=smem, size = 0x4, offset = 0x4, fixed_abs, tag = 'smem constant byte address 0x4 - core index']
  #allocation1 [shape = 'u32[144,128]{1,0:T(1,128)}', space=vmem, size = 0x12000, scoped, tag = 'internal scratch']
  %s0 = inlined_call_operand.vmem [shape: f32[4,253], index: 0, kind: input, shape index: {}]
  %s1 = inlined_call_operand.vmem [shape: f32[253,12], index: 1, kind: input, shape index: {}]
  %s2 = inlined_call_operand.vmem [shape: f32[1,12], index: 2, kind: input, shape index: {}]
  %s3 = inlined_call_operand.vmem [shape: f32[12,128], index: 3, kind: input, shape index: {}]
  %s4 = inlined_call_operand.vmem [shape: f32[1,128], index: 4, kind: input, shape index: {}]
  %s5 = inlined_call_operand.hbm [shape: f32[4,128], index: 5, kind: output, shape index: {}]
  %s6 = sld [smem:[#allocation0]]
  $region30: #{tpu_custom_call.1} parent=0
    _
  %s8 = ssub.s32 1, %s6
  %s9 = scalar_select 0, %s8, %s6
  $region1: #{tpu_custom_call.1} parent=0
    #allocation2 [shape = 'u8[2048]{0}', space=vmem, size = 0x800, scoped, tag = 'output window, operand 0, single buffered']
    #allocation3 [shape = 's32[1]{0}', space=sflag, size = 0x4, scoped, tag = 'scoped memory for tpu_custom_call.1']
    %10 = vsyncpa [#allocation3], 0
    // Predicated region
    $region2: #{tpu_custom_call.1} parent=1 // pred_check
      _
    $region3: #{tpu_custom_call.1} parent=1 // pred_check_branch
      %12 = sbr.rel (0) target = $region5
    $region4: #{tpu_custom_call.1} parent=1 // pred_region
      _
    $region5: #{tpu_custom_call.1} parent=1 // pred_fallthru
      _
    // Predicated region
    $region6: #{tpu_custom_call.1} parent=1 // pred_check
      _
    $region7: #{tpu_custom_call.1} parent=1 // pred_check_branch
      %14 = sbr.rel (0) target = $region9
    $region8: #{tpu_custom_call.1} parent=1 // pred_region
      _
    $region9: #{tpu_custom_call.1} parent=1 // pred_fallthru
      _
    // Predicated region
    $region10: #{tpu_custom_call.1} parent=1 // pred_check
      _
    $region11: #{tpu_custom_call.1} parent=1 // pred_check_branch
      %16 = sbr.rel (0) target = $region13
    $region12: #{tpu_custom_call.1} parent=1 // pred_region
      _
    $region13: #{tpu_custom_call.1} parent=1 // pred_fallthru
      _
    // Predicated region
    $region14: #{tpu_custom_call.1} parent=1 // pred_check
      _
    $region15: #{tpu_custom_call.1} parent=1 // pred_check_branch
      %18 = sbr.rel (0) target = $region17
    $region16: #{tpu_custom_call.1} parent=1 // pred_region
      _
    $region17: #{tpu_custom_call.1} parent=1 // pred_fallthru
      _
    // Predicated region
    $region18: #{tpu_custom_call.1} parent=1 // pred_check
      _
    $region19: #{tpu_custom_call.1} parent=1 // pred_check_branch
      %20 = sbr.rel (0) target = $region21
    $region20: #{tpu_custom_call.1} parent=1 // pred_region
      _
    $region21: #{tpu_custom_call.1} parent=1 // pred_fallthru
      _
    %v21 = vld [vmem:[%s0] sm:$0xff]
    %v22 = vld [vmem:[%s1] sm:$0xff]
    %v23 = vld [vmem:[%s1 + $0x8] sm:$0xff]
    %v24 = vld [vmem:[%s1 + $0x10] sm:$0xff]
    %v25 = vld [vmem:[%s1 + $0x18] sm:$0xff]
    %v26 = vld [vmem:[%s1 + $0x20] sm:$0xff]
    %v27 = vld [vmem:[%s1 + $0x28] sm:$0xff]
    %v28 = vld [vmem:[%s1 + $0x30] sm:$0xff]
    %v29 = vld [vmem:[%s1 + $0x38] sm:$0xff]
    %v30 = vld [vmem:[%s1 + $0x40] sm:$0xff]
    %v31 = vld [vmem:[%s1 + $0x48] sm:$0xff]
    %v32 = vld [vmem:[%s1 + $0x50] sm:$0xff]
    %v33 = vld [vmem:[%s1 + $0x58] sm:$0xff]
    %v34 = vld [vmem:[%s1 + $0x60] sm:$0xff]
    %v35 = vld [vmem:[%s1 + $0x68] sm:$0xff]
    %v36 = vld [vmem:[%s1 + $0x70] sm:$0xff]
    %v37 = vld [vmem:[%s1 + $0x78] sm:$0xff]
    %v38 = vld [vmem:[%s1 + $0x80] sm:$0xff]
    %v39 = vld [vmem:[%s1 + $0x88] sm:$0xff]
    %v40 = vld [vmem:[%s1 + $0x90] sm:$0xff]
    %v41 = vld [vmem:[%s1 + $0x98] sm:$0xff]
    %v42 = vld [vmem:[%s1 + $0xa0] sm:$0xff]
    %v43 = vld [vmem:[%s1 + $0xa8] sm:$0xff]
    %v44 = vld [vmem:[%s1 + $0xb0] sm:$0xff]
    %v45 = vld [vmem:[%s1 + $0xb8] sm:$0xff]
    %v46 = vld [vmem:[%s1 + $0xc0] sm:$0xff]
    %v47 = vld [vmem:[%s1 + $0xc8] sm:$0xff]
    %v48 = vld [vmem:[%s1 + $0xd0] sm:$0xff]
    %v49 = vld [vmem:[%s1 + $0xd8] sm:$0xff]
    %v50 = vld [vmem:[%s1 + $0xe0] sm:$0xff]
    %v51 = vld [vmem:[%s1 + $0xe8] sm:$0xff]
    %v52 = vld [vmem:[%s1 + $0xf0] sm:$0xff]
    %v53 = vld [vmem:[%s1 + $0xf8] sm:$0x1f]
    %v54 = vld [vmem:[%s2] sm:$0x1]
    %v56 = vlaneseq
    %v57 = vshrl.u32 %v56, 7
    %v58 = vsub.s32 0, %v57
    %v59 = vrot.slane %v54, %v58
    %v62 = vcombine.high %v21, %v21
    %vm63 = vcmask 1022976
    %v64 = vsel %vm63, %v62, 0
    %vm66 = vcmask 1044480
    %v68 = vsel %vm66, %v53, 0
    %70 = vmatprep.subr.mxu0 0.0
    %71 = vmatpush1.msra.mxu0 %v37
    %72 = vmatprep.subr.mxu0 0.0
    %73 = vmatpush1.msra.mxu0 %v36
    %74 = vmatprep.subr.mxu0 0.0
    %75 = vmatpush1.msra.mxu0 %v35
    %76 = vmatprep.subr.mxu0 0.0
    %77 = vmatpush1.msra.mxu0 %v34
    %78 = vmatprep.subr.mxu0 0.0
    %79 = vmatpush1.msra.mxu0 %v33
    %80 = vmatprep.subr.mxu0 0.0
    %81 = vmatpush1.msra.mxu0 %v32
    %82 = vmatprep.subr.mxu0 0.0
    %83 = vmatpush1.msra.mxu0 %v31
    %84 = vmatprep.subr.mxu0 0.0
    %85 = vmatpush1.msra.mxu0 %v30
    %86 = vmatprep.subr.mxu0 0.0
    %87 = vmatpush1.msra.mxu0 %v29
    %88 = vmatprep.subr.mxu0 0.0
    %89 = vmatpush1.msra.mxu0 %v28
    %90 = vmatprep.subr.mxu0 0.0
    %91 = vmatpush1.msra.mxu0 %v27
    %92 = vmatprep.subr.mxu0 0.0
    %93 = vmatpush1.msra.mxu0 %v26
    %94 = vmatprep.subr.mxu0 0.0
    %95 = vmatpush1.msra.mxu0 %v25
    %96 = vmatprep.subr.mxu0 0.0
    %97 = vmatpush1.msra.mxu0 %v24
    %98 = vmatprep.subr.mxu0 0.0
    %99 = vmatpush1.msra.mxu0 %v23
    %100 = vmatprep.subr.mxu0 0.0
    %101 = vmatpush1.msra.mxu0 %v22
    %102 = vmatprep.subr.mxu0 0.0
    %103 = vmatpush2.msra.mxu0 %v68
    %104 = vmatprep.subr.mxu0 0.0
    %105 = vmatpush2.msra.mxu0 %v52
    %106 = vmatprep.subr.mxu0 0.0
    %107 = vmatpush2.msra.mxu0 %v51
    %108 = vmatprep.subr.mxu0 0.0
    %109 = vmatpush2.msra.mxu0 %v50
    %110 = vmatprep.subr.mxu0 0.0
    %111 = vmatpush2.msra.mxu0 %v49
    %112 = vmatprep.subr.mxu0 0.0
    %113 = vmatpush2.msra.mxu0 %v48
    %114 = vmatprep.subr.mxu0 0.0
    %115 = vmatpush2.msra.mxu0 %v47
    %116 = vmatprep.subr.mxu0 0.0
    %117 = vmatpush2.msra.mxu0 %v46
    %118 = vmatprep.subr.mxu0 0.0
    %119 = vmatpush2.msra.mxu0 %v45
    %120 = vmatprep.subr.mxu0 0.0
    %121 = vmatpush2.msra.mxu0 %v44
    %122 = vmatprep.subr.mxu0 0.0
    %123 = vmatpush2.msra.mxu0 %v43
    %124 = vmatprep.subr.mxu0 0.0
    %125 = vmatpush2.msra.mxu0 %v42
    %126 = vmatprep.subr.mxu0 0.0
    %127 = vmatpush2.msra.mxu0 %v41
    %128 = vmatprep.subr.mxu0 0.0
    %129 = vmatpush2.msra.mxu0 %v40
    %130 = vmatprep.subr.mxu0 0.0
    %131 = vmatpush2.msra.mxu0 %v39
    %132 = vmatprep.subr.mxu0 0.0
    %133 = vmatpush2.msra.mxu0 %v38
    %134 = vmatprep.mubr.f32.mxu0 %v64
    %135 = vmatmul.mubr.f32.gmra.mxu0 %v21
    %v136 = vpop.f32.mrf.mxu0
    %v137 = vadd.f32 %v59, %v136
    %v138 = vpop.f32.mrf.mxu0
    %139 = vdwg.mxu0
    %v140 = vmax.f32 %v137, 0.0
    %v141 = vld [vmem:[%s3] sm:$0xff]
    %v142 = vld [vmem:[%s3 + $0x8] sm:$0xf]
    %v143 = vld [vmem:[%s4] sm:$0x1]
    %v145 = vlaneseq
    %v146 = vshrl.u32 %v145, 7
    %v147 = vsub.s32 0, %v146
    %v148 = vrot.slane %v143, %v147
    %vm150 = vcmask 97280
    %v152 = vsel %vm150, %v140, 0
    %vm154 = vcmask 1043456
    %v156 = vsel %vm154, %v142, 0
    %158 = vmatprep.subr.mxu0 0.0
    %159 = vmatpush1.msra.mxu0 0.0
    %160 = vmatprep.subr.mxu0 0.0
    %161 = vmatpush1.msra.mxu0 0.0
    %162 = vmatprep.subr.mxu0 0.0
    %163 = vmatpush1.msra.mxu0 0.0
    %164 = vmatprep.subr.mxu0 0.0
    %165 = vmatpush1.msra.mxu0 0.0
    %166 = vmatprep.subr.mxu0 0.0
    %167 = vmatpush1.msra.mxu0 0.0
    %168 = vmatprep.subr.mxu0 0.0
    %169 = vmatpush1.msra.mxu0 0.0
    %170 = vmatprep.subr.mxu0 0.0
    %171 = vmatpush1.msra.mxu0 0.0
    %172 = vmatprep.subr.mxu0 0.0
    %173 = vmatpush1.msra.mxu0 0.0
    %174 = vmatprep.subr.mxu0 0.0
    %175 = vmatpush1.msra.mxu0 0.0
    %176 = vmatprep.subr.mxu0 0.0
    %177 = vmatpush1.msra.mxu0 0.0
    %178 = vmatprep.subr.mxu0 0.0
    %179 = vmatpush1.msra.mxu0 0.0
    %180 = vmatprep.subr.mxu0 0.0
    %181 = vmatpush1.msra.mxu0 0.0
    %182 = vmatprep.subr.mxu0 0.0
    %183 = vmatpush1.msra.mxu0 0.0
    %184 = vmatprep.subr.mxu0 0.0
    %185 = vmatpush1.msra.mxu0 0.0
    %186 = vmatprep.subr.mxu0 0.0
    %187 = vmatpush1.msra.mxu0 %v156
    %188 = vmatprep.subr.mxu0 0.0
    %189 = vmatpush1.msra.mxu0 %v141
    %190 = vmatprep.subr.mxu0 0.0
    %191 = vmatpush2.msra.mxu0 0.0
    %192 = vmatprep.subr.mxu0 0.0
    %193 = vmatpush2.msra.mxu0 0.0
    %194 = vmatprep.subr.mxu0 0.0
    %195 = vmatpush2.msra.mxu0 0.0
    %196 = vmatprep.subr.mxu0 0.0
    %197 = vmatpush2.msra.mxu0 0.0
    %198 = vmatprep.subr.mxu0 0.0
    %199 = vmatpush2.msra.mxu0 0.0
    %200 = vmatprep.subr.mxu0 0.0
    %201 = vmatpush2.msra.mxu0 0.0
    %202 = vmatprep.subr.mxu0 0.0
    %203 = vmatpush2.msra.mxu0 0.0
    %204 = vmatprep.subr.mxu0 0.0
    %205 = vmatpush2.msra.mxu0 0.0
    %206 = vmatprep.subr.mxu0 0.0
    %207 = vmatpush2.msra.mxu0 0.0
    %208 = vmatprep.subr.mxu0 0.0
    %209 = vmatpush2.msra.mxu0 0.0
    %210 = vmatprep.subr.mxu0 0.0
    %211 = vmatpush2.msra.mxu0 0.0
    %212 = vmatprep.subr.mxu0 0.0
    %213 = vmatpush2.msra.mxu0 0.0
    %214 = vmatprep.subr.mxu0 0.0
    %215 = vmatpush2.msra.mxu0 0.0
    %216 = vmatprep.subr.mxu0 0.0
    %217 = vmatpush2.msra.mxu0 0.0
    %218 = vmatprep.subr.mxu0 0.0
    %219 = vmatpush2.msra.mxu0 0.0
    %220 = vmatprep.subr.mxu0 0.0
    %221 = vmatpush2.msra.mxu0 0.0
    %222 = vmatprep.mubr.f32.mxu0 0.0
    %223 = vmatmul.mubr.f32.gmra.mxu0 %v152
    %v224 = vpop.f32.mrf.mxu0
    %v225 = vadd.f32 %v148, %v224
    %v226 = vpop.f32.mrf.mxu0
    %227 = vdwg.mxu0
    %228 = vst [vmem:[#allocation2] sm:$0xf] %v225
    // Predicated region
    $region22: #{tpu_custom_call.1} parent=1 // pred_check
      _
    $region23: #{tpu_custom_call.1} parent=1 // pred_check_branch
      %230 = sbr.rel (0) target = $region25
    $region24: #{tpu_custom_call.1} parent=1 // pred_region
      %s232 = ssub.s32 64, 64
      %233 = vsyncadd [#allocation3], %s232
      %s235 = sshll.u32 [#allocation2], 4
      %s236 = int_to_ptr.vmem [resolvable:$true] %s235
      %238 = dma.vmem_to_hbm [thread:$0]  %s236, 64, %s5, [#allocation3]
    $region25: #{tpu_custom_call.1} parent=1 // pred_fallthru
      _
    // Predicated region
    $region26: #{tpu_custom_call.1} parent=1 // pred_check
      _
    $region27: #{tpu_custom_call.1} parent=1 // pred_check_branch
      %240 = sbr.rel (0) target = $region29
    $region28: #{tpu_custom_call.1} parent=1 // pred_region
      %241 = dma.done [#allocation3], 64
    $region29: #{tpu_custom_call.1} parent=1 // pred_fallthru
      _
    %242 = vsyncpa [#allocation3], 1

</llo_original>
